<compile_context>
chip_gen: v6e
topology: v6e:2x2x1
jax: 0.10.0
libtpu: 0.0.40
codegen_flags: <defaults>
</compile_context>

<pallas_src>
import functools
import numpy as np
import jax
import jax.numpy as jnp
from jax.experimental import pallas as pl
from jax.experimental.pallas import tpu as pltpu  # noqa: F401  (TPU backend assumed)


def _round_up(x, m):
    return (x + m - 1) // m * m


# ---------------------------------------------------------------------------
# Parameter init: torch.nn.init.kaiming_uniform_(fan_in, leaky_relu, a=0.01)
# ---------------------------------------------------------------------------
def kaiming_uniform(key, shape, a=0.01):
    fan_in = shape[1]
    gain = np.sqrt(2.0 / (1.0 + a * a))
    bound = gain * np.sqrt(3.0 / fan_in)
    return jax.random.uniform(key, shape, jnp.float32, -bound, bound)


# ---------------------------------------------------------------------------
# Fused kernel: one matmul against [tokens ; all graph nodes], sigmoid,
# per-column prune (inner_prune for token columns, cross_prune for node
# columns), and zeroing of the lane/sublane padding.
# ---------------------------------------------------------------------------
def _fused_adj_kernel(tokens_ref, keys_ref, adj_ref, *, token_num,
                      valid_rows, valid_cols, inner_prune, cross_prune):
    t = tokens_ref[...]                                            # (Tp, D)
    k = keys_ref[...]                                              # (Kp, D)
    dot = jax.lax.dot_general(t, k, (((1,), (1,)), ((), ())),
                              preferred_element_type=jnp.float32)  # (Tp, Kp)
    sim = jax.nn.sigmoid(dot)

    col = jax.lax.broadcasted_iota(jnp.int32, sim.shape, 1)
    row = jax.lax.broadcasted_iota(jnp.int32, sim.shape, 0)
    thr = jnp.where(col < token_num, inner_prune, cross_prune)
    pruned = jnp.where(sim < thr, 0.0, sim)

    valid = (row < valid_rows) & (col < valid_cols)                # kill pads
    adj_ref[...] = jnp.where(valid, pruned, 0.0)


def fused_adjacency(tokens, graph_x, inner_prune, cross_prune):
    """Returns (padded_slab, inner_adj (T,T), cross_adj (G,T,N))."""
    T, D = tokens.shape
    G, N, _ = graph_x.shape
    K = T + G * N
    Tp = _round_up(T, 8)          # sublane multiple
    Kp = _round_up(K, 128)        # lane-dense output

    keys = jnp.concatenate([tokens, graph_x.reshape(G * N, D)], axis=0)
    keys_p = jnp.pad(keys, ((0, Kp - K), (0, 0)))
    tokens_p = jnp.pad(tokens, ((0, Tp - T), (0, 0)))

    adj = pl.pallas_call(
        functools.partial(_fused_adj_kernel,
                          token_num=T, valid_rows=T, valid_cols=K,
                          inner_prune=float(inner_prune),
                          cross_prune=float(cross_prune)),
        out_shape=jax.ShapeDtypeStruct((Tp, Kp), jnp.float32),
    )(tokens_p, keys_p)

    inner_adj = adj[:T, :T]                                        # (T, T)
    cross_adj = adj[:T, T:K].reshape(T, G, N).transpose(1, 0, 2)   # (G, T, N)
    return adj, inner_adj, cross_adj


# ---------------------------------------------------------------------------
# Full HeavyPrompt.forward semantics
# ---------------------------------------------------------------------------
def heavy_prompt_forward(tokens, graph_x, graph_edges, graph_y,
                         inner_prune=0.01, cross_prune=0.1):
    """Returns (re_graph_list, inner_adj, cross_adj).

    re_graph_list mimics the list of PyG `Data` objects produced before
    `Batch.from_data_list`; each entry has x, edge_index, y.
    """
    T, D = tokens.shape
    G, N, _ = graph_x.shape

    # --- Pallas hot path: one fused kernel ---
    adj, inner_adj, cross_adj = fused_adjacency(
        tokens, graph_x, inner_prune, cross_prune)

    # --- batched node-feature concat: (G, T+N, D), single XLA op ---
    x_all = jnp.concatenate(
        [jnp.broadcast_to(tokens[None], (G, T, D)), graph_x], axis=1)

    # --- single device->host transfer, then host-side dynamic-shape glue ---
    adj_np = np.asarray(adj)
    graph_edges_np = np.asarray(graph_edges)
    graph_y_np = np.asarray(graph_y)

    inner_np = adj_np[:T, :T]
    inner_edge_index = np.stack(np.nonzero(inner_np), axis=0).astype(np.int64)

    re_graph_list = []
    for gi in range(G):
        g_edge_index = graph_edges_np[gi].astype(np.int64) + T
        ca = adj_np[:T, T + gi * N: T + (gi + 1) * N]
        cross_edge_index = np.stack(np.nonzero(ca), axis=0).astype(np.int64)
        cross_edge_index[1] = cross_edge_index[1] + T
        edge_index = np.concatenate(
            [inner_edge_index, g_edge_index, cross_edge_index], axis=1)
        re_graph_list.append(dict(x=x_all[gi], edge_index=edge_index,
                                  y=graph_y_np[gi]))
    # TODO(synk): PyG Batch.from_data_list (cross-graph node-index offsetting
    # / batch vector) is framework packaging, not kernel compute; omitted.
    return re_graph_list, inner_adj, cross_adj


if __name__ == "__main__":
    key = jax.random.PRNGKey(0)
    token_dim, token_num = 32, 8          # HeavyPrompt(token_dim, token_num)
    num_graphs, n_nodes, n_edges = 2, 16, 20

    k_tok, k_x, k_e = jax.random.split(key, 3)
    tokens = kaiming_uniform(k_tok, (token_num, token_dim))          # param
    graph_x = jax.random.normal(k_x, (num_graphs, n_nodes, token_dim),
                                jnp.float32)
    graph_edges = jax.random.randint(k_e, (num_graphs, 2, n_edges),
                                     0, n_nodes)
    graph_y = jnp.arange(num_graphs, dtype=jnp.int32)

    out_list, inner_adj, cross_adj = heavy_prompt_forward(
        tokens, graph_x, graph_edges, graph_y,
        inner_prune=0.01, cross_prune=0.1)
    jax.block_until_ready((inner_adj, cross_adj))

    # ---- sanity checks -----------------------------------------------------
    assert inner_adj.shape == (token_num, token_num)
    assert cross_adj.shape == (num_graphs, token_num, n_nodes)
    assert out_list[0]["x"].shape == (token_num + n_nodes, token_dim)

    # semantic check vs. pure-JAX reference (tolerant near the prune
    # thresholds to allow for MXU vs XLA matmul rounding differences)
    def _check(pruned, sim_ref, thr, eps=2e-2):
        pruned = np.asarray(pruned)
        sim_ref = np.asarray(sim_ref)
        nz = pruned != 0.0
        # surviving entries carry the sigmoid similarity value
        np.testing.assert_allclose(pruned[nz], sim_ref[nz], atol=eps, rtol=eps)
        assert np.all(pruned[nz] >= thr - eps)
        # pruned-to-zero entries were below the threshold
        assert np.all(sim_ref[~nz] < thr + eps)

    sim_inner_ref = jax.nn.sigmoid(
        jnp.dot(tokens, tokens.T, preferred_element_type=jnp.float32))
    _check(inner_adj, sim_inner_ref, 0.01)
    for gi in range(num_graphs):
        sim_cross_ref = jax.nn.sigmoid(
            jnp.dot(tokens, graph_x[gi].T, preferred_element_type=jnp.float32))
        _check(cross_adj[gi], sim_cross_ref, 0.1)

    print("KERNEL_OK")
</pallas_src>

<mosaic_0001>
module attributes {stable_mosaic.version = 11 : i64} {
  func.func @_fused_adj_kernel(%arg0: memref<8x32xf32, #tpu.memory_space<vmem>>, %arg1: memref<128x32xf32, #tpu.memory_space<vmem>>, %arg2: memref<8x128xf32, #tpu.memory_space<vmem>>) attributes {dimension_semantics = [], scalar_prefetch = 0 : i64, scratch_operands = 0 : i64, tpu.core_type = #tpu.core_type<tc>} {
    %c0 = arith.constant 0 : index
    %c0_0 = arith.constant 0 : index
    %0 = vector.load %arg0[%c0, %c0_0] : memref<8x32xf32, #tpu.memory_space<vmem>>, vector<8x32xf32>
    %c0_1 = arith.constant 0 : index
    %c0_2 = arith.constant 0 : index
    %1 = vector.load %arg1[%c0_1, %c0_2] : memref<128x32xf32, #tpu.memory_space<vmem>>, vector<128x32xf32>
    %cst = arith.constant dense<0.000000e+00> : vector<8x128xf32>
    %2 = tpu.matmul %0, %1, %cst {dimension_numbers = #tpu.dot_dimension_numbers<[1], [1], [0], [0], [0, 0, 1, 0], [], []>} : vector<8x32xf32>, vector<128x32xf32>, vector<8x128xf32> -> vector<8x128xf32>
    %3 = arith.negf %2 : vector<8x128xf32>
    %4 = math.exp %3 : vector<8x128xf32>
    %cst_3 = arith.constant 1.000000e+00 : f32
    %5 = vector.broadcast %cst_3 : f32 to vector<8x128xf32>
    %6 = arith.addf %5, %4 : vector<8x128xf32>
    %7 = arith.divf %5, %6 : vector<8x128xf32>
    %8 = tpu.iota {dimensions = array<i32: 1>} : vector<8x128xi32>
    %9 = tpu.iota {dimensions = array<i32: 0>} : vector<8x128xi32>
    %c8_i32 = arith.constant 8 : i32
    %10 = vector.broadcast %c8_i32 : i32 to vector<8x128xi32>
    %11 = arith.cmpi slt, %8, %10 : vector<8x128xi32>
    %cst_4 = arith.constant 0.00999999977 : f32
    %cst_5 = arith.constant 1.000000e-01 : f32
    %12 = vector.broadcast %cst_4 : f32 to vector<8x128xf32>
    %13 = vector.broadcast %cst_5 : f32 to vector<8x128xf32>
    %14 = arith.select %11, %12, %13 : vector<8x128xi1>, vector<8x128xf32>
    %15 = arith.cmpf olt, %7, %14 : vector<8x128xf32>
    %cst_6 = arith.constant 0.000000e+00 : f32
    %16 = vector.broadcast %cst_6 : f32 to vector<8x128xf32>
    %17 = arith.select %15, %16, %7 : vector<8x128xi1>, vector<8x128xf32>
    %c8_i32_7 = arith.constant 8 : i32
    %18 = vector.broadcast %c8_i32_7 : i32 to vector<8x128xi32>
    %19 = arith.cmpi slt, %9, %18 : vector<8x128xi32>
    %c40_i32 = arith.constant 40 : i32
    %20 = vector.broadcast %c40_i32 : i32 to vector<8x128xi32>
    %21 = arith.cmpi slt, %8, %20 : vector<8x128xi32>
    %22 = arith.andi %19, %21 : vector<8x128xi1>
    %cst_8 = arith.constant 0.000000e+00 : f32
    %23 = vector.broadcast %cst_8 : f32 to vector<8x128xf32>
    %24 = arith.select %22, %17, %23 : vector<8x128xi1>, vector<8x128xf32>
    %c0_9 = arith.constant 0 : index
    %c0_10 = arith.constant 0 : index
    %25 = vector.load %arg2[%c0_9, %c0_10] : memref<8x128xf32, #tpu.memory_space<vmem>>, vector<8x128xf32>
    tpu.vector_store %arg2[%c0_9, %c0_10], %24 {strides = array<i32>} : memref<8x128xf32, #tpu.memory_space<vmem>>, vector<8x128xf32>,
    return
  }
}

</mosaic_0001>

<llo_original>
// kernel: tpu_custom_call.1
$region0: #{tpu_custom_call.1}
  #allocation0 [shape = 'u32[]', space=smem, size = 0x4, offset = 0x4, fixed_abs, tag = 'smem constant byte address 0x4 - core index']
  #allocation1 [shape = 'u32[144,128]{1,0:T(1,128)}', space=vmem, size = 0x12000, scoped, tag = 'internal scratch']
  %s0 = inlined_call_operand.vmem [shape: f32[8,32], index: 0, kind: input, shape index: {}]
  %s1 = inlined_call_operand.vmem [shape: f32[128,32], index: 1, kind: input, shape index: {}]
  %s2 = inlined_call_operand.hbm [shape: f32[8,128], index: 2, kind: output, shape index: {}]
  %s3 = sld [smem:[#allocation0]]
  $region18: #{tpu_custom_call.1} parent=0
    _
  %s5 = ssub.s32 1, %s3
  %s6 = scalar_select 0, %s5, %s3
  $region1: #{tpu_custom_call.1} parent=0
    #allocation2 [shape = 'u8[4096]{0}', space=vmem, size = 0x1000, scoped, tag = 'output window, operand 0, single buffered']
    #allocation3 [shape = 's32[1]{0}', space=sflag, size = 0x4, scoped, tag = 'scoped memory for tpu_custom_call.1']
    %7 = vsyncpa [#allocation3], 0
    // Predicated region
    $region2: #{tpu_custom_call.1} parent=1 // pred_check
      _
    $region3: #{tpu_custom_call.1} parent=1 // pred_check_branch
      %9 = sbr.rel (0) target = $region5
    $region4: #{tpu_custom_call.1} parent=1 // pred_region
      _
    $region5: #{tpu_custom_call.1} parent=1 // pred_fallthru
      _
    // Predicated region
    $region6: #{tpu_custom_call.1} parent=1 // pred_check
      _
    $region7: #{tpu_custom_call.1} parent=1 // pred_check_branch
      %11 = sbr.rel (0) target = $region9
    $region8: #{tpu_custom_call.1} parent=1 // pred_region
      _
    $region9: #{tpu_custom_call.1} parent=1 // pred_fallthru
      _
    %v12 = vld [vmem:[%s0] sm:$0xff]
    %v13 = vld [vmem:[%s1] sm:$0xff]
    %v14 = vld [vmem:[%s1 + $0x8] sm:$0xff]
    %v15 = vld [vmem:[%s1 + $0x10] sm:$0xff]
    %v16 = vld [vmem:[%s1 + $0x18] sm:$0xff]
    %v17 = vld [vmem:[%s1 + $0x20] sm:$0xff]
    %v18 = vld [vmem:[%s1 + $0x28] sm:$0xff]
    %v19 = vld [vmem:[%s1 + $0x30] sm:$0xff]
    %v20 = vld [vmem:[%s1 + $0x38] sm:$0xff]
    %v21 = vld [vmem:[%s1 + $0x40] sm:$0xff]
    %v22 = vld [vmem:[%s1 + $0x48] sm:$0xff]
    %v23 = vld [vmem:[%s1 + $0x50] sm:$0xff]
    %v24 = vld [vmem:[%s1 + $0x58] sm:$0xff]
    %v25 = vld [vmem:[%s1 + $0x60] sm:$0xff]
    %v26 = vld [vmem:[%s1 + $0x68] sm:$0xff]
    %v27 = vld [vmem:[%s1 + $0x70] sm:$0xff]
    %v28 = vld [vmem:[%s1 + $0x78] sm:$0xff]
    %vm29 = vcmask 261120
    %v31 = vsel %vm29, %v12, 0
    %v34 = vsel %vm29, %v13, 0
    %v37 = vsel %vm29, %v14, 0
    %v40 = vsel %vm29, %v15, 0
    %v43 = vsel %vm29, %v16, 0
    %v46 = vsel %vm29, %v17, 0
    %v49 = vsel %vm29, %v18, 0
    %v52 = vsel %vm29, %v19, 0
    %v55 = vsel %vm29, %v20, 0
    %v58 = vsel %vm29, %v21, 0
    %v61 = vsel %vm29, %v22, 0
    %v64 = vsel %vm29, %v23, 0
    %v67 = vsel %vm29, %v24, 0
    %v70 = vsel %vm29, %v25, 0
    %v73 = vsel %vm29, %v26, 0
    %v76 = vsel %vm29, %v27, 0
    %v79 = vsel %vm29, %v28, 0
    %81 = vmatprep.subr.mxu0 0.0
    %82 = vmatpush1.xpose.msra.mxu0 %v79
    %83 = vmatprep.subr.mxu0 0.0
    %84 = vmatpush1.xpose.msra.mxu0 %v76
    %85 = vmatprep.subr.mxu0 0.0
    %86 = vmatpush1.xpose.msra.mxu0 %v73
    %87 = vmatprep.subr.mxu0 0.0
    %88 = vmatpush1.xpose.msra.mxu0 %v70
    %89 = vmatprep.subr.mxu0 0.0
    %90 = vmatpush1.xpose.msra.mxu0 %v67
    %91 = vmatprep.subr.mxu0 0.0
    %92 = vmatpush1.xpose.msra.mxu0 %v64
    %93 = vmatprep.subr.mxu0 0.0
    %94 = vmatpush1.xpose.msra.mxu0 %v61
    %95 = vmatprep.subr.mxu0 0.0
    %96 = vmatpush1.xpose.msra.mxu0 %v58
    %97 = vmatprep.subr.mxu0 0.0
    %98 = vmatpush1.xpose.msra.mxu0 %v55
    %99 = vmatprep.subr.mxu0 0.0
    %100 = vmatpush1.xpose.msra.mxu0 %v52
    %101 = vmatprep.subr.mxu0 0.0
    %102 = vmatpush1.xpose.msra.mxu0 %v49
    %103 = vmatprep.subr.mxu0 0.0
    %104 = vmatpush1.xpose.msra.mxu0 %v46
    %105 = vmatprep.subr.mxu0 0.0
    %106 = vmatpush1.xpose.msra.mxu0 %v43
    %107 = vmatprep.subr.mxu0 0.0
    %108 = vmatpush1.xpose.msra.mxu0 %v40
    %109 = vmatprep.subr.mxu0 0.0
    %110 = vmatpush1.xpose.msra.mxu0 %v37
    %111 = vmatprep.subr.mxu0 0.0
    %112 = vmatpush1.xpose.msra.mxu0 %v34
    %113 = vmatprep.subr.mxu0 0.0
    %114 = vmatpush2.xpose.msra.mxu0 0.0
    %115 = vmatprep.subr.mxu0 0.0
    %116 = vmatpush2.xpose.msra.mxu0 0.0
    %117 = vmatprep.subr.mxu0 0.0
    %118 = vmatpush2.xpose.msra.mxu0 0.0
    %119 = vmatprep.subr.mxu0 0.0
    %120 = vmatpush2.xpose.msra.mxu0 0.0
    %121 = vmatprep.subr.mxu0 0.0
    %122 = vmatpush2.xpose.msra.mxu0 0.0
    %123 = vmatprep.subr.mxu0 0.0
    %124 = vmatpush2.xpose.msra.mxu0 0.0
    %125 = vmatprep.subr.mxu0 0.0
    %126 = vmatpush2.xpose.msra.mxu0 0.0
    %127 = vmatprep.subr.mxu0 0.0
    %128 = vmatpush2.xpose.msra.mxu0 0.0
    %129 = vmatprep.subr.mxu0 0.0
    %130 = vmatpush2.xpose.msra.mxu0 0.0
    %131 = vmatprep.subr.mxu0 0.0
    %132 = vmatpush2.xpose.msra.mxu0 0.0
    %133 = vmatprep.subr.mxu0 0.0
    %134 = vmatpush2.xpose.msra.mxu0 0.0
    %135 = vmatprep.subr.mxu0 0.0
    %136 = vmatpush2.xpose.msra.mxu0 0.0
    %137 = vmatprep.subr.mxu0 0.0
    %138 = vmatpush2.xpose.msra.mxu0 0.0
    %139 = vmatprep.subr.mxu0 0.0
    %140 = vmatpush2.xpose.msra.mxu0 0.0
    %141 = vmatprep.subr.mxu0 0.0
    %142 = vmatpush2.xpose.msra.mxu0 0.0
    %143 = vmatprep.subr.mxu0 0.0
    %144 = vmatpush2.xpose.msra.mxu0 0.0
    %145 = vmatprep.mubr.f32.mxu0 0.0
    %146 = vmatmul.mubr.f32.gmra.mxu0 %v31
    %v147 = vpop.f32.mrf.mxu0
    %v148 = vadd.f32 0.0, %v147
    %v149 = vpop.f32.mrf.mxu0
    %150 = vdwg.mxu0
    %v151 = vxor.u32 %v148, 2147483648
    %v152 = vmul.f32 %v151, 1.442695
    %v153 = vpow.pop %v152
    %v154 = vadd.f32 %v153, 1.0
    %v155 = vrcp.pop %v154
    %v156 = vmul.f32 1.0, %v155
    %v157 = vlaneseq
    %v158 = vand.u32 %v157, 127
    %v159 = vlaneseq
    %v160 = vshrl.u32 %v159, 7
    %vm161 = vcmp.lt.s32.totalorder %v158, 8
    %v162 = vsel %vm161, 0.01, 0.1
    %vm163 = vcmp.lt.f32.partialorder %v156, %v162
    %v164 = vsel %vm163, 0.0, %v156
    %vm165 = vcmp.lt.s32.totalorder %v160, 8
    %vm166 = vcmp.lt.s32.totalorder %v158, 40
    %vm167 = vmand %vm165, %vm166
    %v168 = vsel %vm167, %v164, 0.0
    %169 = vst [vmem:[#allocation2] sm:$0xff] %v168
    // Predicated region
    $region10: #{tpu_custom_call.1} parent=1 // pred_check
      _
    $region11: #{tpu_custom_call.1} parent=1 // pred_check_branch
      %171 = sbr.rel (0) target = $region13
    $region12: #{tpu_custom_call.1} parent=1 // pred_region
      %s173 = ssub.s32 128, 128
      %174 = vsyncadd [#allocation3], %s173
      %s176 = sshll.u32 [#allocation2], 4
      %s177 = int_to_ptr.vmem [resolvable:$true] %s176
      %179 = dma.vmem_to_hbm [thread:$0]  %s177, 128, %s2, [#allocation3]
    $region13: #{tpu_custom_call.1} parent=1 // pred_fallthru
      _
    // Predicated region
    $region14: #{tpu_custom_call.1} parent=1 // pred_check
      _
    $region15: #{tpu_custom_call.1} parent=1 // pred_check_branch
      %181 = sbr.rel (0) target = $region17
    $region16: #{tpu_custom_call.1} parent=1 // pred_region
      %182 = dma.done [#allocation3], 128
    $region17: #{tpu_custom_call.1} parent=1 // pred_fallthru
      _
    %183 = vsyncpa [#allocation3], 1

</llo_original>
